<compile_context>
chip_gen: v7x
topology: tpu7x:2x2x1
jax: 0.10.0
libtpu: 0.0.40
codegen_flags: <defaults>
</compile_context>

<pallas_src>
import jax
import jax.numpy as jnp
from jax.experimental import pallas as pl
from jax.experimental.pallas import tpu as pltpu


def _round_up(a: int, b: int) -> int:
    return ((a + b - 1) // b) * b


def remap_kernel(table_ref, x_ref, o_ref):
    # table_ref: SMEM (K,)        -- scalar-prefetched remap dictionary
    # x_ref:     VMEM (tm, LANE)  -- int32 tile of input labels
    # o_ref:     VMEM (tm, LANE)  -- output tile (table dtype)
    x = x_ref[...]
    K = table_ref.shape[0]
    # out = table[x] via unrolled compare/select; init with table[0] so the
    # sweep needs only K-1 selects (OOB labels map to table[0]).
    out = jnp.full(x.shape, table_ref[0], dtype=o_ref.dtype)
    for k in range(1, K):
        out = jnp.where(x == k, table_ref[k].astype(o_ref.dtype), out)
    o_ref[...] = out


def remap_targets(x, table, *, lane=1024, tm=256):
    """Pallas equivalent of RemapTargets.forward: table[x].

    x:     integer array of any shape (labels expected in [0, K))
    table: 1-D array of shape (K,); output has x.shape and table.dtype
    """
    orig_shape = x.shape
    n = int(x.size)
    out_dtype = table.dtype

    # Lay the data out as a lane-dense (rows, lane) slab.
    rows = pl.cdiv(n, lane)

    # Effective tile height: as large as possible for DMA efficiency, but
    # keep >= 2 grid steps when the data permits (v7x has 2 TensorCores
    # sharding the "parallel" axis).  Always a multiple of 8 sublanes.
    tm_eff = min(tm, _round_up(rows, 8))
    if tm_eff == tm and rows < 2 * tm:
        tm_eff = _round_up(pl.cdiv(rows, 2), 8)

    rows_padded = _round_up(rows, tm_eff)
    n_padded = rows_padded * lane

    x_flat = x.reshape(-1).astype(jnp.int32)
    if n_padded != n:
        # Pad with label 0; padded outputs are discarded after the call.
        x_flat = jnp.concatenate(
            [x_flat, jnp.zeros((n_padded - n,), jnp.int32)])
    x2 = x_flat.reshape(rows_padded, lane)

    grid = rows_padded // tm_eff
    out = pl.pallas_call(
        remap_kernel,
        out_shape=jax.ShapeDtypeStruct((rows_padded, lane), out_dtype),
        grid_spec=pltpu.PrefetchScalarGridSpec(
            num_scalar_prefetch=1,          # table -> SMEM, first kernel arg
            grid=(grid,),
            in_specs=[pl.BlockSpec((tm_eff, lane), lambda i, tbl: (i, 0))],
            out_specs=pl.BlockSpec((tm_eff, lane), lambda i, tbl: (i, 0)),
        ),
        compiler_params=pltpu.CompilerParams(
            dimension_semantics=("parallel",),
        ),
    )(table, x2)

    return out.reshape(-1)[:n].reshape(orig_shape)


if __name__ == "__main__":
    key = jax.random.PRNGKey(0)

    K = 10                                  # number of classes in remap dict
    # Deterministic "remap_dict": reverse the class ids (0 -> 9, 1 -> 8, ...)
    remap_dict = (K - 1) - jnp.arange(K, dtype=jnp.int32)

    k1, k2 = jax.random.split(key)

    # Case 1: small, nicely shaped batch of labels
    x1 = jax.random.randint(k1, (16, 128), minval=0, maxval=K, dtype=jnp.int32)
    out1 = jax.block_until_ready(remap_targets(x1, remap_dict))
    assert out1.shape == x1.shape and out1.dtype == remap_dict.dtype
    assert bool(jnp.all(out1 == jnp.take(remap_dict, x1)))

    # Case 2: odd shape exercising the flatten / pad / tail handling
    x2 = jax.random.randint(k2, (13, 100), minval=0, maxval=K, dtype=jnp.int32)
    out2 = jax.block_until_ready(remap_targets(x2, remap_dict))
    assert out2.shape == x2.shape and out2.dtype == remap_dict.dtype
    assert bool(jnp.all(out2 == jnp.take(remap_dict, x2)))

    print("KERNEL_OK")
</pallas_src>

<mosaic_0001>
module attributes {stable_mosaic.version = 11 : i64} {
  func.func @remap_kernel(%arg0: i32, %arg1: memref<10xi32, #tpu.memory_space<smem>>, %arg2: memref<8x1024xi32, #tpu.memory_space<vmem>>, %arg3: memref<8x1024xi32, #tpu.memory_space<vmem>>) attributes {dimension_semantics = [#tpu.dimension_semantics<parallel>], iteration_bounds = array<i64: 1>, scalar_prefetch = 1 : i64, scratch_operands = 0 : i64, tpu.core_type = #tpu.core_type<tc>, window_params = [{transform_indices = @transform_0, window_bounds = array<i64: 8, 1024>}, {transform_indices = @transform_1, window_bounds = array<i64: 8, 1024>}]} {
    %c0 = arith.constant 0 : index
    %c0_0 = arith.constant 0 : index
    %0 = vector.load %arg2[%c0, %c0_0] : memref<8x1024xi32, #tpu.memory_space<vmem>>, vector<8x1024xi32>
    %c0_1 = arith.constant 0 : index
    %1 = memref.load %arg1[%c0_1] : memref<10xi32, #tpu.memory_space<smem>>
    %2 = vector.broadcast %1 : i32 to vector<8x1024xi32>
    %c1_i32 = arith.constant 1 : i32
    %3 = vector.broadcast %c1_i32 : i32 to vector<8x1024xi32>
    %4 = arith.cmpi eq, %0, %3 : vector<8x1024xi32>
    %c1 = arith.constant 1 : index
    %5 = memref.load %arg1[%c1] : memref<10xi32, #tpu.memory_space<smem>>
    %6 = vector.broadcast %5 : i32 to vector<8x1024xi32>
    %7 = arith.select %4, %6, %2 : vector<8x1024xi1>, vector<8x1024xi32>
    %c2_i32 = arith.constant 2 : i32
    %8 = vector.broadcast %c2_i32 : i32 to vector<8x1024xi32>
    %9 = arith.cmpi eq, %0, %8 : vector<8x1024xi32>
    %c2 = arith.constant 2 : index
    %10 = memref.load %arg1[%c2] : memref<10xi32, #tpu.memory_space<smem>>
    %11 = vector.broadcast %10 : i32 to vector<8x1024xi32>
    %12 = arith.select %9, %11, %7 : vector<8x1024xi1>, vector<8x1024xi32>
    %c3_i32 = arith.constant 3 : i32
    %13 = vector.broadcast %c3_i32 : i32 to vector<8x1024xi32>
    %14 = arith.cmpi eq, %0, %13 : vector<8x1024xi32>
    %c3 = arith.constant 3 : index
    %15 = memref.load %arg1[%c3] : memref<10xi32, #tpu.memory_space<smem>>
    %16 = vector.broadcast %15 : i32 to vector<8x1024xi32>
    %17 = arith.select %14, %16, %12 : vector<8x1024xi1>, vector<8x1024xi32>
    %c4_i32 = arith.constant 4 : i32
    %18 = vector.broadcast %c4_i32 : i32 to vector<8x1024xi32>
    %19 = arith.cmpi eq, %0, %18 : vector<8x1024xi32>
    %c4 = arith.constant 4 : index
    %20 = memref.load %arg1[%c4] : memref<10xi32, #tpu.memory_space<smem>>
    %21 = vector.broadcast %20 : i32 to vector<8x1024xi32>
    %22 = arith.select %19, %21, %17 : vector<8x1024xi1>, vector<8x1024xi32>
    %c5_i32 = arith.constant 5 : i32
    %23 = vector.broadcast %c5_i32 : i32 to vector<8x1024xi32>
    %24 = arith.cmpi eq, %0, %23 : vector<8x1024xi32>
    %c5 = arith.constant 5 : index
    %25 = memref.load %arg1[%c5] : memref<10xi32, #tpu.memory_space<smem>>
    %26 = vector.broadcast %25 : i32 to vector<8x1024xi32>
    %27 = arith.select %24, %26, %22 : vector<8x1024xi1>, vector<8x1024xi32>
    %c6_i32 = arith.constant 6 : i32
    %28 = vector.broadcast %c6_i32 : i32 to vector<8x1024xi32>
    %29 = arith.cmpi eq, %0, %28 : vector<8x1024xi32>
    %c6 = arith.constant 6 : index
    %30 = memref.load %arg1[%c6] : memref<10xi32, #tpu.memory_space<smem>>
    %31 = vector.broadcast %30 : i32 to vector<8x1024xi32>
    %32 = arith.select %29, %31, %27 : vector<8x1024xi1>, vector<8x1024xi32>
    %c7_i32 = arith.constant 7 : i32
    %33 = vector.broadcast %c7_i32 : i32 to vector<8x1024xi32>
    %34 = arith.cmpi eq, %0, %33 : vector<8x1024xi32>
    %c7 = arith.constant 7 : index
    %35 = memref.load %arg1[%c7] : memref<10xi32, #tpu.memory_space<smem>>
    %36 = vector.broadcast %35 : i32 to vector<8x1024xi32>
    %37 = arith.select %34, %36, %32 : vector<8x1024xi1>, vector<8x1024xi32>
    %c8_i32 = arith.constant 8 : i32
    %38 = vector.broadcast %c8_i32 : i32 to vector<8x1024xi32>
    %39 = arith.cmpi eq, %0, %38 : vector<8x1024xi32>
    %c8 = arith.constant 8 : index
    %40 = memref.load %arg1[%c8] : memref<10xi32, #tpu.memory_space<smem>>
    %41 = vector.broadcast %40 : i32 to vector<8x1024xi32>
    %42 = arith.select %39, %41, %37 : vector<8x1024xi1>, vector<8x1024xi32>
    %c9_i32 = arith.constant 9 : i32
    %43 = vector.broadcast %c9_i32 : i32 to vector<8x1024xi32>
    %44 = arith.cmpi eq, %0, %43 : vector<8x1024xi32>
    %c9 = arith.constant 9 : index
    %45 = memref.load %arg1[%c9] : memref<10xi32, #tpu.memory_space<smem>>
    %46 = vector.broadcast %45 : i32 to vector<8x1024xi32>
    %47 = arith.select %44, %46, %42 : vector<8x1024xi1>, vector<8x1024xi32>
    %c0_2 = arith.constant 0 : index
    %c0_3 = arith.constant 0 : index
    %48 = vector.load %arg3[%c0_2, %c0_3] : memref<8x1024xi32, #tpu.memory_space<vmem>>, vector<8x1024xi32>
    tpu.vector_store %arg3[%c0_2, %c0_3], %47 {strides = array<i32>} : memref<8x1024xi32, #tpu.memory_space<vmem>>, vector<8x1024xi32>,
    return
  }
  func.func @transform_0(%arg0: i32, %arg1: memref<10xi32, #tpu.memory_space<smem>>) -> (i32, i32) {
    %c0_i32 = arith.constant 0 : i32
    %c0_i32_0 = arith.constant 0 : i32
    return %arg0, %c0_i32 : i32, i32
  }
  func.func @transform_1(%arg0: i32, %arg1: memref<10xi32, #tpu.memory_space<smem>>) -> (i32, i32) {
    %c0_i32 = arith.constant 0 : i32
    %c0_i32_0 = arith.constant 0 : i32
    return %arg0, %c0_i32 : i32, i32
  }
}

</mosaic_0001>

<llo_original>
// kernel: tpu_custom_call.1
$region0: #{tpu_custom_call.1}
  #allocation0 [shape = 'u32[]', space=smem, size = 0x4, offset = 0x4, fixed_abs, tag = 'smem constant byte address 0x4 - core index']
  #allocation1 [shape = 'u32[144,128]{1,0:T(1,128)}', space=vmem, size = 0x12000, scoped, tag = 'internal scratch']
  #allocation2 [shape = 's32[1]{0}', space=sflag, size = 0x4, scoped, tag = 'scoped memory for tpu_custom_call.1']
  #allocation3 [shape = 'u8[512]{0}', space=smem, size = 0x200, scoped, tag = 'prefetched SMEM operand 0']
  %s0 = inlined_call_operand.hbm [shape: s32[10], index: 0, kind: input, shape index: {}]
  %s1 = inlined_call_operand.hbm [shape: s32[8,1024], index: 1, kind: input, shape index: {}]
  %s2 = inlined_call_operand.hbm [shape: s32[8,1024], index: 2, kind: output, shape index: {}]
  %s3 = sld [smem:[#allocation0]]
  $region18: #{tpu_custom_call.1} parent=0
    _
  %s5 = ssub.s32 1, %s3
  %s6 = scalar_select 0, %s5, %s3
  %8 = dma.hbm_to_smem %s0, 16, [#allocation3], [#allocation2]
  %9 = dma.done [#allocation2], 16
  %10 = sfence
  $region1: #{tpu_custom_call.1} parent=0
    #allocation4 [shape = 'u8[32768]{0}', space=vmem, size = 0x8000, scoped, tag = 'input window, operand 1, single buffered']
    #allocation5 [shape = 's32[1]{0}', space=sflag, size = 0x4, scoped, tag = 'scoped memory for tpu_custom_call.1']
    #allocation6 [shape = 's32[1]{0}', space=sflag, size = 0x4, scoped, tag = 'scoped memory for tpu_custom_call.1']
    #allocation7 [shape = 'u8[32768]{0}', space=vmem, size = 0x8000, scoped, tag = 'output window, operand 0, single buffered']
    %11 = vsyncpa [#allocation5], 0
    %12 = vsyncpa [#allocation6], 0
    // Predicated region
    $region2: #{tpu_custom_call.1} parent=1 // pred_check
      _
    $region3: #{tpu_custom_call.1} parent=1 // pred_check_branch
      %14 = sbr.rel (0) target = $region5
    $region4: #{tpu_custom_call.1} parent=1 // pred_region
      %s16 = ssub.s32 1024, 1024
      %17 = vsyncadd [#allocation5], %s16
      %s19 = sshll.u32 [#allocation4], 4
      %s20 = int_to_ptr.vmem [resolvable:$true] %s19
      %22 = dma.hbm_to_vmem [thread:$0]  %s1, 1024, %s20, [#allocation5]
    $region5: #{tpu_custom_call.1} parent=1 // pred_fallthru
      _
    // Predicated region
    $region6: #{tpu_custom_call.1} parent=1 // pred_check
      _
    $region7: #{tpu_custom_call.1} parent=1 // pred_check_branch
      %24 = sbr.rel (0) target = $region9
    $region8: #{tpu_custom_call.1} parent=1 // pred_region
      %25 = dma.done [#allocation5], 1024
    $region9: #{tpu_custom_call.1} parent=1 // pred_fallthru
      _
    %v26 = vld [vmem:[#allocation4] sm:$0xff]
    %v27 = vld [vmem:[#allocation4 + $0x8] sm:$0xff]
    %v28 = vld [vmem:[#allocation4 + $0x10] sm:$0xff]
    %v29 = vld [vmem:[#allocation4 + $0x18] sm:$0xff]
    %v30 = vld [vmem:[#allocation4 + $0x20] sm:$0xff]
    %v31 = vld [vmem:[#allocation4 + $0x28] sm:$0xff]
    %v32 = vld [vmem:[#allocation4 + $0x30] sm:$0xff]
    %v33 = vld [vmem:[#allocation4 + $0x38] sm:$0xff]
    %s34 = sld [smem:[#allocation3]]
    %v35 = vstv %s34
    %vm36 = vcmp.eq.s32.totalorder %v26, 1
    %vm37 = vcmp.eq.s32.totalorder %v27, 1
    %vm38 = vcmp.eq.s32.totalorder %v28, 1
    %vm39 = vcmp.eq.s32.totalorder %v29, 1
    %vm40 = vcmp.eq.s32.totalorder %v30, 1
    %vm41 = vcmp.eq.s32.totalorder %v31, 1
    %vm42 = vcmp.eq.s32.totalorder %v32, 1
    %vm43 = vcmp.eq.s32.totalorder %v33, 1
    %s44 = sld [smem:[#allocation3 + $0x1]]
    %v45 = vstv %s44
    %v46 = vsel %vm36, %v45, %v35
    %v47 = vsel %vm37, %v45, %v35
    %v48 = vsel %vm38, %v45, %v35
    %v49 = vsel %vm39, %v45, %v35
    %v50 = vsel %vm40, %v45, %v35
    %v51 = vsel %vm41, %v45, %v35
    %v52 = vsel %vm42, %v45, %v35
    %v53 = vsel %vm43, %v45, %v35
    %vm54 = vcmp.eq.s32.totalorder %v26, 2
    %vm55 = vcmp.eq.s32.totalorder %v27, 2
    %vm56 = vcmp.eq.s32.totalorder %v28, 2
    %vm57 = vcmp.eq.s32.totalorder %v29, 2
    %vm58 = vcmp.eq.s32.totalorder %v30, 2
    %vm59 = vcmp.eq.s32.totalorder %v31, 2
    %vm60 = vcmp.eq.s32.totalorder %v32, 2
    %vm61 = vcmp.eq.s32.totalorder %v33, 2
    %s62 = sld [smem:[#allocation3 + $0x2]]
    %v63 = vstv %s62
    %v64 = vsel %vm54, %v63, %v46
    %v65 = vsel %vm55, %v63, %v47
    %v66 = vsel %vm56, %v63, %v48
    %v67 = vsel %vm57, %v63, %v49
    %v68 = vsel %vm58, %v63, %v50
    %v69 = vsel %vm59, %v63, %v51
    %v70 = vsel %vm60, %v63, %v52
    %v71 = vsel %vm61, %v63, %v53
    %vm72 = vcmp.eq.s32.totalorder %v26, 3
    %vm73 = vcmp.eq.s32.totalorder %v27, 3
    %vm74 = vcmp.eq.s32.totalorder %v28, 3
    %vm75 = vcmp.eq.s32.totalorder %v29, 3
    %vm76 = vcmp.eq.s32.totalorder %v30, 3
    %vm77 = vcmp.eq.s32.totalorder %v31, 3
    %vm78 = vcmp.eq.s32.totalorder %v32, 3
    %vm79 = vcmp.eq.s32.totalorder %v33, 3
    %s80 = sld [smem:[#allocation3 + $0x3]]
    %v81 = vstv %s80
    %v82 = vsel %vm72, %v81, %v64
    %v83 = vsel %vm73, %v81, %v65
    %v84 = vsel %vm74, %v81, %v66
    %v85 = vsel %vm75, %v81, %v67
    %v86 = vsel %vm76, %v81, %v68
    %v87 = vsel %vm77, %v81, %v69
    %v88 = vsel %vm78, %v81, %v70
    %v89 = vsel %vm79, %v81, %v71
    %vm90 = vcmp.eq.s32.totalorder %v26, 4
    %vm91 = vcmp.eq.s32.totalorder %v27, 4
    %vm92 = vcmp.eq.s32.totalorder %v28, 4
    %vm93 = vcmp.eq.s32.totalorder %v29, 4
    %vm94 = vcmp.eq.s32.totalorder %v30, 4
    %vm95 = vcmp.eq.s32.totalorder %v31, 4
    %vm96 = vcmp.eq.s32.totalorder %v32, 4
    %vm97 = vcmp.eq.s32.totalorder %v33, 4
    %s98 = sld [smem:[#allocation3 + $0x4]]
    %v99 = vstv %s98
    %v100 = vsel %vm90, %v99, %v82
    %v101 = vsel %vm91, %v99, %v83
    %v102 = vsel %vm92, %v99, %v84
    %v103 = vsel %vm93, %v99, %v85
    %v104 = vsel %vm94, %v99, %v86
    %v105 = vsel %vm95, %v99, %v87
    %v106 = vsel %vm96, %v99, %v88
    %v107 = vsel %vm97, %v99, %v89
    %vm108 = vcmp.eq.s32.totalorder %v26, 5
    %vm109 = vcmp.eq.s32.totalorder %v27, 5
    %vm110 = vcmp.eq.s32.totalorder %v28, 5
    %vm111 = vcmp.eq.s32.totalorder %v29, 5
    %vm112 = vcmp.eq.s32.totalorder %v30, 5
    %vm113 = vcmp.eq.s32.totalorder %v31, 5
    %vm114 = vcmp.eq.s32.totalorder %v32, 5
    %vm115 = vcmp.eq.s32.totalorder %v33, 5
    %s116 = sld [smem:[#allocation3 + $0x5]]
    %v117 = vstv %s116
    %v118 = vsel %vm108, %v117, %v100
    %v119 = vsel %vm109, %v117, %v101
    %v120 = vsel %vm110, %v117, %v102
    %v121 = vsel %vm111, %v117, %v103
    %v122 = vsel %vm112, %v117, %v104
    %v123 = vsel %vm113, %v117, %v105
    %v124 = vsel %vm114, %v117, %v106
    %v125 = vsel %vm115, %v117, %v107
    %vm126 = vcmp.eq.s32.totalorder %v26, 6
    %vm127 = vcmp.eq.s32.totalorder %v27, 6
    %vm128 = vcmp.eq.s32.totalorder %v28, 6
    %vm129 = vcmp.eq.s32.totalorder %v29, 6
    %vm130 = vcmp.eq.s32.totalorder %v30, 6
    %vm131 = vcmp.eq.s32.totalorder %v31, 6
    %vm132 = vcmp.eq.s32.totalorder %v32, 6
    %vm133 = vcmp.eq.s32.totalorder %v33, 6
    %s134 = sld [smem:[#allocation3 + $0x6]]
    %v135 = vstv %s134
    %v136 = vsel %vm126, %v135, %v118
    %v137 = vsel %vm127, %v135, %v119
    %v138 = vsel %vm128, %v135, %v120
    %v139 = vsel %vm129, %v135, %v121
    %v140 = vsel %vm130, %v135, %v122
    %v141 = vsel %vm131, %v135, %v123
    %v142 = vsel %vm132, %v135, %v124
    %v143 = vsel %vm133, %v135, %v125
    %vm144 = vcmp.eq.s32.totalorder %v26, 7
    %vm145 = vcmp.eq.s32.totalorder %v27, 7
    %vm146 = vcmp.eq.s32.totalorder %v28, 7
    %vm147 = vcmp.eq.s32.totalorder %v29, 7
    %vm148 = vcmp.eq.s32.totalorder %v30, 7
    %vm149 = vcmp.eq.s32.totalorder %v31, 7
    %vm150 = vcmp.eq.s32.totalorder %v32, 7
    %vm151 = vcmp.eq.s32.totalorder %v33, 7
    %s152 = sld [smem:[#allocation3 + $0x7]]
    %v153 = vstv %s152
    %v154 = vsel %vm144, %v153, %v136
    %v155 = vsel %vm145, %v153, %v137
    %v156 = vsel %vm146, %v153, %v138
    %v157 = vsel %vm147, %v153, %v139
    %v158 = vsel %vm148, %v153, %v140
    %v159 = vsel %vm149, %v153, %v141
    %v160 = vsel %vm150, %v153, %v142
    %v161 = vsel %vm151, %v153, %v143
    %vm162 = vcmp.eq.s32.totalorder %v26, 8
    %vm163 = vcmp.eq.s32.totalorder %v27, 8
    %vm164 = vcmp.eq.s32.totalorder %v28, 8
    %vm165 = vcmp.eq.s32.totalorder %v29, 8
    %vm166 = vcmp.eq.s32.totalorder %v30, 8
    %vm167 = vcmp.eq.s32.totalorder %v31, 8
    %vm168 = vcmp.eq.s32.totalorder %v32, 8
    %vm169 = vcmp.eq.s32.totalorder %v33, 8
    %s170 = sld [smem:[#allocation3 + $0x8]]
    %v171 = vstv %s170
    %v172 = vsel %vm162, %v171, %v154
    %v173 = vsel %vm163, %v171, %v155
    %v174 = vsel %vm164, %v171, %v156
    %v175 = vsel %vm165, %v171, %v157
    %v176 = vsel %vm166, %v171, %v158
    %v177 = vsel %vm167, %v171, %v159
    %v178 = vsel %vm168, %v171, %v160
    %v179 = vsel %vm169, %v171, %v161
    %vm180 = vcmp.eq.s32.totalorder %v26, 9
    %vm181 = vcmp.eq.s32.totalorder %v27, 9
    %vm182 = vcmp.eq.s32.totalorder %v28, 9
    %vm183 = vcmp.eq.s32.totalorder %v29, 9
    %vm184 = vcmp.eq.s32.totalorder %v30, 9
    %vm185 = vcmp.eq.s32.totalorder %v31, 9
    %vm186 = vcmp.eq.s32.totalorder %v32, 9
    %vm187 = vcmp.eq.s32.totalorder %v33, 9
    %s188 = sld [smem:[#allocation3 + $0x9]]
    %v189 = vstv %s188
    %v190 = vsel %vm180, %v189, %v172
    %v191 = vsel %vm181, %v189, %v173
    %v192 = vsel %vm182, %v189, %v174
    %v193 = vsel %vm183, %v189, %v175
    %v194 = vsel %vm184, %v189, %v176
    %v195 = vsel %vm185, %v189, %v177
    %v196 = vsel %vm186, %v189, %v178
    %v197 = vsel %vm187, %v189, %v179
    %198 = vst [vmem:[#allocation7] sm:$0xff] %v190
    %199 = vst [vmem:[#allocation7 + $0x8] sm:$0xff] %v191
    %200 = vst [vmem:[#allocation7 + $0x10] sm:$0xff] %v192
    %201 = vst [vmem:[#allocation7 + $0x18] sm:$0xff] %v193
    %202 = vst [vmem:[#allocation7 + $0x20] sm:$0xff] %v194
    %203 = vst [vmem:[#allocation7 + $0x28] sm:$0xff] %v195
    %204 = vst [vmem:[#allocation7 + $0x30] sm:$0xff] %v196
    %205 = vst [vmem:[#allocation7 + $0x38] sm:$0xff] %v197
    // Predicated region
    $region10: #{tpu_custom_call.1} parent=1 // pred_check
      _
    $region11: #{tpu_custom_call.1} parent=1 // pred_check_branch
      %207 = sbr.rel (0) target = $region13
    $region12: #{tpu_custom_call.1} parent=1 // pred_region
      %s209 = ssub.s32 1024, 1024
      %210 = vsyncadd [#allocation6], %s209
      %s212 = sshll.u32 [#allocation7], 4
      %s213 = int_to_ptr.vmem [resolvable:$true] %s212
      %215 = dma.vmem_to_hbm [thread:$0]  %s213, 1024, %s2, [#allocation6]
    $region13: #{tpu_custom_call.1} parent=1 // pred_fallthru
      _
    // Predicated region
    $region14: #{tpu_custom_call.1} parent=1 // pred_check
      _
    $region15: #{tpu_custom_call.1} parent=1 // pred_check_branch
      %217 = sbr.rel (0) target = $region17
    $region16: #{tpu_custom_call.1} parent=1 // pred_region
      %218 = dma.done [#allocation6], 1024
    $region17: #{tpu_custom_call.1} parent=1 // pred_fallthru
      _
    %219 = vsyncpa [#allocation5], 1
    %220 = vsyncpa [#allocation6], 1

</llo_original>
